<compile_context>
chip_gen: v5e
topology: v5e:2x2
jax: 0.10.0
libtpu: 0.0.40
codegen_flags: <defaults>
</compile_context>

<pallas_src>
import jax
import jax.numpy as jnp
from jax.experimental import pallas as pl
from jax.experimental.pallas import tpu as pltpu


def _onehot_dictionary_kernel(x_ref, dict_ref, o_ref):
    # x_ref:    (T, V_pad)     f32  (pad columns are -inf)
    # dict_ref: (V_pad, E_pad) f32  (pad rows/cols are 0, resident in VMEM)
    # o_ref:    (T, E_pad)     f32
    x = x_ref[...]
    rows, vocab = x.shape

    # First-max argmax (matches torch.argmax tie-breaking). Implemented as a
    # max + masked-min pair because both lower to plain VPU/XLU reductions.
    lane_ids = jax.lax.broadcasted_iota(jnp.int32, (rows, vocab), 1)
    max_val = jnp.max(x, axis=-1, keepdims=True)                       # (T, 1)
    arg = jnp.min(jnp.where(x == max_val, lane_ids, vocab),
                  axis=-1, keepdims=True)                              # (T, 1)

    # Embedding gather expressed as a one-hot matmul -> runs on the MXU.
    onehot = (lane_ids == arg).astype(dict_ref.dtype)                  # (T, V_pad)
    o_ref[...] = jnp.dot(
        onehot, dict_ref[...], preferred_element_type=jnp.float32
    ).astype(o_ref.dtype)


def _round_up(a, m):
    return ((a + m - 1) // m) * m


def _round_down(a, m):
    return (a // m) * m


def one_hot_dictionary(x, dictionary, *, max_tile_rows=None, vmem_budget_bytes=None):
    """x: (B, N, vocab) f32, dictionary: (vocab, emb) f32 -> (B, N, emb)."""
    B, N, V = x.shape
    Vd, E = dictionary.shape
    assert V == Vd
    rows = B * N
    itemsize = 4  # float32

    # ---- Generation-aware VMEM budget --------------------------------------
    try:
        vmem_capacity = int(pltpu.get_tpu_info().vmem_capacity_bytes)
    except Exception:
        vmem_capacity = 64 << 20          # conservative fallback (v7x per-TC)
    small_vmem = vmem_capacity <= (64 << 20)
    if vmem_budget_bytes is None:
        vmem_budget_bytes = (48 << 20) if small_vmem else (96 << 20)
    if max_tile_rows is None:
        max_tile_rows = 512 if small_vmem else 1024

    # ---- Pad vocab to a lane multiple (x pads = -inf so argmax ignores them,
    #      dictionary pad rows = 0 so they are harmless even if selected). ----
    V_pad = _round_up(max(V, 128), 128)
    x2d = x.reshape(rows, V)
    if V_pad != V:
        x2d = jnp.pad(x2d, ((0, 0), (0, V_pad - V)), constant_values=-jnp.inf)
        dictionary = jnp.pad(dictionary, ((0, V_pad - V), (0, 0)))

    # ---- Pad emb only when it is already lane-sized; for tiny E the 4x HBM
    #      writeback of a 128-wide pad costs more than masked stores save. ----
    if E >= 128 and E % 128 != 0:
        E_pad = _round_up(E, 128)
        dictionary = jnp.pad(dictionary, ((0, 0), (0, E_pad - E)))
    else:
        E_pad = E

    # ---- Dictionary BlockSpec: constant index_map => fetched once. Request a
    #      single pipeline buffer so a second (useless) copy is not reserved.
    dict_index_map = lambda i: (0, 0)
    try:
        dict_spec = pl.BlockSpec((V_pad, E_pad), dict_index_map,
                                 pipeline_mode=pl.Buffered(1))
        dict_bufs = 1
    except (TypeError, AttributeError):
        dict_spec = pl.BlockSpec((V_pad, E_pad), dict_index_map)
        dict_bufs = 2

    # ---- Analytic tile solve (no halve-until-fits). -------------------------
    table_bytes = dict_bufs * V_pad * E_pad * itemsize
    per_row_bytes = (2 * V_pad      # x tile, double-buffered
                     + 3 * V_pad    # live (T, V) intermediates: iota, masked ids, one-hot
                     + 2 * E_pad    # output tile, double-buffered
                     ) * itemsize
    avail = vmem_budget_bytes - table_bytes
    if avail < 8 * per_row_bytes:
        # TODO(synk): add a vocab/emb-tiled fallback for dictionaries too large
        # to stay resident in VMEM alongside an 8-row tile.
        raise ValueError(
            f"dictionary ({table_bytes} B) too large for VMEM budget "
            f"({vmem_budget_bytes} B); vocab/emb tiling not implemented")
    tile_rows = min(max_tile_rows, _round_down(avail // per_row_bytes, 8))

    # Keep enough grid steps for dual-TC parts (v7x shards the "parallel" row
    # axis across 2 TensorCores) and some pipeline overlap elsewhere.
    min_grid_steps = 4 if small_vmem else 2
    tile_rows = min(tile_rows, max(8, _round_down(rows // min_grid_steps, 8)))
    tile_rows = min(tile_rows, _round_up(rows, 8))
    tile_rows = max(8, tile_rows)

    # ---- Pad rows to a tile multiple (no divisibility assert). --------------
    rows_pad = _round_up(rows, tile_rows)
    if rows_pad != rows:
        x2d = jnp.pad(x2d, ((0, rows_pad - rows), (0, 0)))

    footprint = table_bytes + tile_rows * per_row_bytes
    vmem_limit = int(min(vmem_capacity, footprint + (8 << 20)))

    out = pl.pallas_call(
        _onehot_dictionary_kernel,
        out_shape=jax.ShapeDtypeStruct((rows_pad, E_pad), dictionary.dtype),
        grid_spec=pltpu.PrefetchScalarGridSpec(
            num_scalar_prefetch=0,
            grid=(rows_pad // tile_rows,),
            in_specs=[
                pl.BlockSpec((tile_rows, V_pad), lambda i: (i, 0)),
                dict_spec,
            ],
            out_specs=pl.BlockSpec((tile_rows, E_pad), lambda i: (i, 0)),
        ),
        compiler_params=pltpu.CompilerParams(
            dimension_semantics=("parallel",),   # shards rows across TCs on v7x
            vmem_limit_bytes=vmem_limit,
        ),
    )(x2d, dictionary)

    return out[:rows, :E].reshape(B, N, E)


if __name__ == "__main__":
    # Small shapes consistent with the module: batch=2, seq=8, vocab=32, emb=32.
    B, N, VOCAB, EMB = 2, 8, 32, 32

    key = jax.random.PRNGKey(0)
    kx, kd = jax.random.split(key)
    x = jax.random.normal(kx, (B, N, VOCAB), dtype=jnp.float32)
    # Deterministic synthetic embedding table (nn.Embedding weight: (vocab, emb)).
    dictionary = jax.random.normal(kd, (VOCAB, EMB), dtype=jnp.float32)

    out = one_hot_dictionary(x, dictionary)
    out = jax.block_until_ready(out)

    # Pure-JAX reference of the PyTorch forward.
    tokens = jnp.argmax(x, axis=-1)
    ref = jnp.take(dictionary, tokens, axis=0)

    assert out.shape == (B, N, EMB), out.shape
    assert jnp.allclose(out, ref, atol=1e-5, rtol=1e-5), "mismatch vs reference"
    print("KERNEL_OK")
</pallas_src>

<mosaic_0001>
module attributes {stable_mosaic.version = 11 : i64} {
  func.func @_onehot_dictionary_kernel(%arg0: i32, %arg1: memref<8x128xf32, #tpu.memory_space<vmem>>, %arg2: memref<128x32xf32, #tpu.memory_space<vmem>>, %arg3: memref<8x32xf32, #tpu.memory_space<vmem>>) attributes {dimension_semantics = [#tpu.dimension_semantics<parallel>], iteration_bounds = array<i64: 2>, scalar_prefetch = 0 : i64, scratch_operands = 0 : i64, tpu.core_type = #tpu.core_type<tc>, window_params = [{transform_indices = @transform_0, window_bounds = array<i64: 8, 128>}, {pipeline_mode = #tpu.pipeline_mode<synchronous>, transform_indices = @transform_1, window_bounds = array<i64: 128, 32>}, {transform_indices = @transform_2, window_bounds = array<i64: 8, 32>}]} {
    %c0 = arith.constant 0 : index
    %c0_0 = arith.constant 0 : index
    %0 = vector.load %arg1[%c0, %c0_0] : memref<8x128xf32, #tpu.memory_space<vmem>>, vector<8x128xf32>
    %1 = tpu.iota {dimensions = array<i32: 1>} : vector<8x128xi32>
    %cst = arith.constant dense<0xFF800000> : vector<8xf32>
    %2 = vector.multi_reduction <maximumf>, %0, %cst [1] : vector<8x128xf32> to vector<8xf32>
    %3 = vector.shape_cast %2 : vector<8xf32> to vector<8x1xf32>
    %4 = vector.broadcast %3 : vector<8x1xf32> to vector<8x128xf32>
    %5 = arith.cmpf oeq, %0, %4 : vector<8x128xf32>
    %c128_i32 = arith.constant 128 : i32
    %6 = vector.broadcast %c128_i32 : i32 to vector<8x128xi32>
    %7 = arith.select %5, %1, %6 : vector<8x128xi1>, vector<8x128xi32>
    %cst_1 = arith.constant dense<2147483647> : vector<8xi32>
    %8 = vector.multi_reduction <minsi>, %7, %cst_1 [1] : vector<8x128xi32> to vector<8xi32>
    %9 = vector.shape_cast %8 : vector<8xi32> to vector<8x1xi32>
    %10 = vector.broadcast %9 : vector<8x1xi32> to vector<8x128xi32>
    %11 = arith.cmpi eq, %1, %10 : vector<8x128xi32>
    %12 = arith.extui %11 : vector<8x128xi1> to vector<8x128xi32>
    %13 = arith.sitofp %12 : vector<8x128xi32> to vector<8x128xf32>
    %c0_2 = arith.constant 0 : index
    %c0_3 = arith.constant 0 : index
    %14 = vector.load %arg2[%c0_2, %c0_3] : memref<128x32xf32, #tpu.memory_space<vmem>>, vector<128x32xf32>
    %cst_4 = arith.constant dense<0.000000e+00> : vector<8x32xf32>
    %15 = tpu.matmul %13, %14, %cst_4 {dimension_numbers = #tpu.dot_dimension_numbers<[1], [0], [0], [1], [0, 0, 1, 1], [], []>} : vector<8x128xf32>, vector<128x32xf32>, vector<8x32xf32> -> vector<8x32xf32>
    %c0_5 = arith.constant 0 : index
    %c0_6 = arith.constant 0 : index
    %16 = vector.load %arg3[%c0_5, %c0_6] : memref<8x32xf32, #tpu.memory_space<vmem>>, vector<8x32xf32>
    tpu.vector_store %arg3[%c0_5, %c0_6], %15 {strides = array<i32>} : memref<8x32xf32, #tpu.memory_space<vmem>>, vector<8x32xf32>,
    return
  }
  func.func @transform_0(%arg0: i32) -> (i32, i32) {
    %c0_i32 = arith.constant 0 : i32
    %c0_i32_0 = arith.constant 0 : i32
    return %arg0, %c0_i32 : i32, i32
  }
  func.func @transform_1(%arg0: i32) -> (i32, i32) {
    %c0_i32 = arith.constant 0 : i32
    %c0_i32_0 = arith.constant 0 : i32
    %c0_i32_1 = arith.constant 0 : i32
    return %c0_i32, %c0_i32_0 : i32, i32
  }
  func.func @transform_2(%arg0: i32) -> (i32, i32) {
    %c0_i32 = arith.constant 0 : i32
    %c0_i32_0 = arith.constant 0 : i32
    return %arg0, %c0_i32 : i32, i32
  }
}

</mosaic_0001>

<llo_original>
// kernel: tpu_custom_call.1
$region0: #{tpu_custom_call.1}
  #allocation0 [shape = 'u32[]', space=smem, size = 0x4, offset = 0x4, fixed_abs, tag = 'smem constant byte address 0x4 - core index']
  #allocation1 [shape = 'u32[72,128]{1,0:T(1,128)}', space=vmem, size = 0x9000, scoped, tag = 'internal scratch']
  %s0 = inlined_call_operand.vmem [shape: f32[16,128], index: 0, kind: input, shape index: {}]
  %s1 = inlined_call_operand.vmem [shape: f32[128,32], index: 1, kind: input, shape index: {}]
  %s2 = inlined_call_operand.hbm [shape: f32[16,32], index: 2, kind: output, shape index: {}]
  %s3 = sld [smem:[#allocation0]]
  $region41: #{tpu_custom_call.1} parent=0
    _
  %s5 = ssub.s32 1, %s3
  %s6 = scalar_select 0, %s5, %s3
  $region1: #{tpu_custom_call.1} parent=0
    #allocation2 [shape = 'u8[8192]{0}', space=vmem, size = 0x2000, scoped, tag = 'output window, operand 0']
    #allocation3 [shape = 's32[2]{0}', space=sflag, size = 0x8, scoped, tag = 'scoped memory for tpu_custom_call.1']
    %7 = vsyncpa [#allocation3], 0
    %s8 = scalar_lea.sflag [#allocation3], 1
    %9 = vsyncpa %s8, 0
    loop: start=0, step=1, limit=4
    $region2: #{tpu_custom_call.1} parent=1 // loop_pre_header
      _
    $region3: #{tpu_custom_call.1} parent=1 // loop_header
      %s11 = sphi 0, %s15
      %p12 = scmp.ge.s32.totalorder %s11, 4
      %s21 = sphi 0, %s23
      %s24 = sphi 0, %s21
      %s25 = sphi 0, %s24
      %s41 = sphi 0, %s25
      %s45 = sphi 0, %s45
      %s47 = sphi 0, %s45
      %s48 = sphi 0, %s47
      %s62 = sphi 0, %s48
      %s68 = sphi 0, %s70
      %s71 = sphi 0, %s68
      %s72 = sphi 0, %s71
      %s88 = sphi 0, %s72
    $region4: #{tpu_custom_call.1} parent=1 // loop_header_branch
      %14 = sbr.rel (%p12) target = $region8
    $region5: #{tpu_custom_call.1} parent=1 // loop_body
      %s16 = ssub.s32 %s11, 1
      %s17 = ssub.s32 %s11, 2
      %s18 = sadd.s32 %s11, 1
      %s19 = ssub.s32 %s11, %s18
      %p20 = scmp.eq.s32.totalorder %s19, 0
      %s22 = sadd.s32 %s21, 1
      %s23 = scalar_select %p20, %s21, %s22
      %p26 = pneg %p20
      %p27 = scmp.eq.s32.totalorder %s11, 1
      %p28 = por %p26, %p27
      %p29 = scmp.ne.s32.totalorder %s21, %s24
      %p30 = scmp.eq.s32.totalorder %s11, 0
      %p31 = por %p29, %p30
      %p32 = scmp.ne.s32.totalorder %s21, %s24
      %p33 = scmp.eq.s32.totalorder %s16, 1
      %p34 = por %p32, %p33
      %p35 = scmp.ne.s32.totalorder %s24, %s25
      %p36 = scmp.eq.s32.totalorder %s16, 0
      %p37 = por %p35, %p36
      %p38 = scmp.ne.s32.totalorder %s24, %s25
      %p39 = scmp.eq.s32.totalorder %s17, 1
      %p40 = por %p38, %p39
      %p42 = scmp.ne.s32.totalorder %s25, %s41
      %p43 = scmp.eq.s32.totalorder %s17, 0
      %p44 = por %p42, %p43
      %s46 = sadd.s32 %s45, 1
      %p49 = scmp.eq.s32.totalorder %s11, 1
      %p50 = scmp.ne.s32.totalorder %s45, %s47
      %p51 = scmp.eq.s32.totalorder %s11, 0
      %p52 = por %p50, %p51
      %p53 = scmp.ne.s32.totalorder %s45, %s47
      %p54 = scmp.eq.s32.totalorder %s16, 1
      %p55 = por %p53, %p54
      %p56 = scmp.ne.s32.totalorder %s47, %s48
      %p57 = scmp.eq.s32.totalorder %s16, 0
      %p58 = por %p56, %p57
      %p59 = scmp.ne.s32.totalorder %s47, %s48
      %p60 = scmp.eq.s32.totalorder %s17, 1
      %p61 = por %p59, %p60
      %p63 = scmp.ne.s32.totalorder %s48, %s62
      %p64 = scmp.eq.s32.totalorder %s17, 0
      %p65 = por %p63, %p64
      %s66 = ssub.s32 %s11, %s18
      %p67 = scmp.eq.s32.totalorder %s66, 0
      %s69 = sadd.s32 %s68, 1
      %s70 = scalar_select %p67, %s68, %s69
      %p73 = pneg %p67
      %p74 = scmp.eq.s32.totalorder %s11, 1
      %p75 = por %p73, %p74
      %p76 = scmp.ne.s32.totalorder %s68, %s71
      %p77 = scmp.eq.s32.totalorder %s11, 0
      %p78 = por %p76, %p77
      %p79 = scmp.ne.s32.totalorder %s68, %s71
      %p80 = scmp.eq.s32.totalorder %s16, 1
      %p81 = por %p79, %p80
      %p82 = scmp.ne.s32.totalorder %s71, %s72
      %p83 = scmp.eq.s32.totalorder %s16, 0
      %p84 = por %p82, %p83
      %p85 = scmp.ne.s32.totalorder %s71, %s72
      %p86 = scmp.eq.s32.totalorder %s17, 1
      %p87 = por %p85, %p86
      %p89 = scmp.ne.s32.totalorder %s72, %s88
      %p90 = scmp.eq.s32.totalorder %s17, 0
      %p91 = por %p89, %p90
      %p92 = scmp.le.s32.totalorder 1, %s11
      %p93 = scmp.lt.s32.totalorder %s11, 3
      %p94 = pnand %p92, %p93
      %p95 = pneg %p94
      // Predicated region
      $region9: #{tpu_custom_call.1} parent=5 // pred_check
        _
      $region10: #{tpu_custom_call.1} parent=5 // pred_check_branch
        %97 = sbr.rel (%p94) target = $region12
      $region11: #{tpu_custom_call.1} parent=5 // pred_region
        %s98 = ssub.s32 %s11, 1
        // Predicated region
        $region13: #{tpu_custom_call.1} parent=11 // pred_check
          %p99 = pneg %p58
        $region14: #{tpu_custom_call.1} parent=11 // pred_check_branch
          %101 = sbr.rel (%p99) target = $region16
        $region15: #{tpu_custom_call.1} parent=11 // pred_region
          _
        $region16: #{tpu_custom_call.1} parent=11 // pred_fallthru
          _
      $region12: #{tpu_custom_call.1} parent=5 // pred_fallthru
        _
      %p102 = scmp.lt.s32.totalorder %s11, 2
      // Predicated region
      $region17: #{tpu_custom_call.1} parent=5 // pred_check
        %p103 = pneg %p102
      $region18: #{tpu_custom_call.1} parent=5 // pred_check_branch
        %105 = sbr.rel (%p103) target = $region20
      $region19: #{tpu_custom_call.1} parent=5 // pred_region
        // Predicated region
        $region21: #{tpu_custom_call.1} parent=19 // pred_check
          %p106 = pneg %p31
        $region22: #{tpu_custom_call.1} parent=19 // pred_check_branch
          %108 = sbr.rel (%p106) target = $region24
        $region23: #{tpu_custom_call.1} parent=19 // pred_region
          %p109 = scmp.lt.s32.totalorder %s11, 1
          %s110 = scalar_select %p109, %s11, 1
          %s111 = smul.addr %s110, 8
          %s112 = scalar_lea.vmem %s0, %s111
        $region24: #{tpu_custom_call.1} parent=19 // pred_fallthru
          _
      $region20: #{tpu_custom_call.1} parent=5 // pred_fallthru
        _
      %p113 = scmp.le.s32.totalorder 1, %s11
      %p114 = scmp.lt.s32.totalorder %s11, 3
      %p115 = pnand %p113, %p114
      %p116 = pneg %p115
      // Predicated region
      $region25: #{tpu_custom_call.1} parent=5 // pred_check
        _
      $region26: #{tpu_custom_call.1} parent=5 // pred_check_branch
        %118 = sbr.rel (%p115) target = $region28
      $region27: #{tpu_custom_call.1} parent=5 // pred_region
        %s119 = ssub.s32 %s11, 1
        %p120 = scmp.lt.s32.totalorder %s16, 1
        %s121 = scalar_select %p120, %s16, 1
        %s122 = smul.addr %s121, 8
        %s123 = scalar_lea.vmem %s0, %s122
        %p124 = pneg %p37
        %p125 = pneg %p34
        %p126 = pneg %p58
        %p127 = pneg %p55
        %p128 = pneg %p84
        %p129 = pneg %p81
        %s130 = sand.u32 %s71, 1
        %s131 = scalar_lea.sflag [#allocation3], %s130
        %s132 = sand.u32 %s71, 1
        %s133 = smul.addr %s132, 8
        %s134 = scalar_lea.vmem [#allocation2], %s133
        %p135 = scmp.lt.s32.totalorder %s16, 1
        %s136 = scalar_select %p135, %s16, 1
        %s137 = smul.addr %s136, 8
        %s138 = scalar_lea.vmem %s0, %s137
        %v139 = vld [vmem:[%s138] sm:$0xff]
        %v140 = vlaneseq
        %v141 = vand.u32 %v140, 127
        %142 = vmax.xlane.f32.xlu0 %v139
        %v143 = vpop.xlane.xlu0 %142
        %vm144 = vcmp.eq.f32.partialorder %v139, %v143
        %v145 = vsel %vm144, %v141, 128
        %v146 = vand.u32 %v145, 65535
        %v147 = vshra.s32 %v145, 16
        %v148 = vcvt.s32.f32 %v146
        %v149 = vcvt.s32.f32 %v147
        %150 = vmin.xlane.f32.xlu0 %v149
        %v151 = vpop.xlane.xlu0 %150
        %vm152 = vcmp.eq.f32.partialorder %v149, %v151
        %v153 = vsel %vm152, %v148, inf
        %154 = vmin.xlane.f32.xlu0 %v153
        %v155 = vpop.xlane.xlu0 %154
        %v156 = vcvt.f32.s32 %v155
        %v157 = vcvt.f32.s32 %v151
        %v158 = vshll.u32 %v157, 16
        %v159 = vadd.s32 %v158, %v156
        %vm160 = vcmp.eq.s32.totalorder %v141, %v159
        %v161 = vsel %vm160, 1, 0
        %v162 = vcvt.s32.f32 %v161
        %v163 = vld [vmem:[%s1] sm:$0xff]
        %v164 = vld [vmem:[%s1 + $0x8] sm:$0xff]
        %v165 = vld [vmem:[%s1 + $0x10] sm:$0xff]
        %v166 = vld [vmem:[%s1 + $0x18] sm:$0xff]
        %v167 = vld [vmem:[%s1 + $0x20] sm:$0xff]
        %v168 = vld [vmem:[%s1 + $0x28] sm:$0xff]
        %v169 = vld [vmem:[%s1 + $0x30] sm:$0xff]
        %v170 = vld [vmem:[%s1 + $0x38] sm:$0xff]
        %v171 = vld [vmem:[%s1 + $0x40] sm:$0xff]
        %v172 = vld [vmem:[%s1 + $0x48] sm:$0xff]
        %v173 = vld [vmem:[%s1 + $0x50] sm:$0xff]
        %v174 = vld [vmem:[%s1 + $0x58] sm:$0xff]
        %v175 = vld [vmem:[%s1 + $0x60] sm:$0xff]
        %v176 = vld [vmem:[%s1 + $0x68] sm:$0xff]
        %v177 = vld [vmem:[%s1 + $0x70] sm:$0xff]
        %v178 = vld [vmem:[%s1 + $0x78] sm:$0xff]
        %179 = vmatpush.msra.mxu0 %v178
        %180 = vmatpush.msra.mxu0 %v177
        %181 = vmatpush.msra.mxu0 %v176
        %182 = vmatpush.msra.mxu0 %v175
        %183 = vmatpush.msra.mxu0 %v174
        %184 = vmatpush.msra.mxu0 %v173
        %185 = vmatpush.msra.mxu0 %v172
        %186 = vmatpush.msra.mxu0 %v171
        %187 = vmatpush.msra.mxu0 %v170
        %188 = vmatpush.msra.mxu0 %v169
        %189 = vmatpush.msra.mxu0 %v168
        %190 = vmatpush.msra.mxu0 %v167
        %191 = vmatpush.msra.mxu0 %v166
        %192 = vmatpush.msra.mxu0 %v165
        %193 = vmatpush.msra.mxu0 %v164
        %194 = vmatpush.msra.mxu0 %v163
        %195 = vmatmul.f32.gmra.mxu0 %v162
        %v196 = vpop.f32.mrf.mxu0
        %v197 = vadd.f32 0.0, %v196
        %198 = vdwg.mxu0
        %vm199 = vcmask 261120
        %200 = vst.msk [vmem:[%s134] sm:$0xff] %vm199, %v197
        %s201 = sand.u32 %s71, 1
        %s202 = scalar_lea.sflag [#allocation3], %s201
        %s203 = sand.u32 %s71, 1
        %s204 = smul.addr %s203, 8
        %s205 = scalar_lea.vmem [#allocation2], %s204
        // Predicated region
        $region29: #{tpu_custom_call.1} parent=27 // pred_check
          %p206 = pneg %p81
        $region30: #{tpu_custom_call.1} parent=27 // pred_check_branch
          %208 = sbr.rel (%p206) target = $region32
        $region31: #{tpu_custom_call.1} parent=27 // pred_region
          %210 = vsyncadd %s202, 0
          %s211 = smul.addr %s16, 8
          %s212 = scalar_lea.hbm %s2, %s211
          %s214 = sshll.u32 %s205, 4
          %s215 = int_to_ptr.vmem [resolvable:$true] %s214
          %s216 = sshll.u32 %s212, 4
          %s217 = int_to_ptr.hbm [resolvable:$true] %s216
          %219 = dma.vmem_to_hbm [thread:$0]  %s215, 128, %s217, %s202
        $region32: #{tpu_custom_call.1} parent=27 // pred_fallthru
          _
      $region28: #{tpu_custom_call.1} parent=5 // pred_fallthru
        _
      %p220 = scmp.le.s32.totalorder 2, %s11
      // Predicated region
      $region33: #{tpu_custom_call.1} parent=5 // pred_check
        %p221 = pneg %p220
      $region34: #{tpu_custom_call.1} parent=5 // pred_check_branch
        %223 = sbr.rel (%p221) target = $region36
      $region35: #{tpu_custom_call.1} parent=5 // pred_region
        %s224 = ssub.s32 %s11, 2
        // Predicated region
        $region37: #{tpu_custom_call.1} parent=35 // pred_check
          %p225 = pneg %p87
        $region38: #{tpu_custom_call.1} parent=35 // pred_check_branch
          %227 = sbr.rel (%p225) target = $region40
        $region39: #{tpu_custom_call.1} parent=35 // pred_region
          %s228 = sand.u32 %s72, 1
          %s229 = scalar_lea.sflag [#allocation3], %s228
          %s230 = sand.u32 %s72, 1
          %s231 = smul.addr %s230, 8
          %s232 = scalar_lea.vmem [#allocation2], %s231
          %234 = dma.done %s229, 128
        $region40: #{tpu_custom_call.1} parent=35 // pred_fallthru
          _
      $region36: #{tpu_custom_call.1} parent=5 // pred_fallthru
        _
    $region6: #{tpu_custom_call.1} parent=1 // loop_footer
      %s15 = sadd.s32 1, %s11
    $region7: #{tpu_custom_call.1} parent=1 // loop_footer_branch
      %10 = sbr.rel target = $region3
    $region8: #{tpu_custom_call.1} parent=1 // loop_exit
      _
    %235 = vsyncpa [#allocation3], 1
    %s236 = scalar_lea.sflag [#allocation3], 1
    %237 = vsyncpa %s236, 1

</llo_original>
